<compile_context>
chip_gen: v5e
topology: v5e:2x2
jax: 0.10.0
libtpu: 0.0.40
codegen_flags: <defaults>
</compile_context>

<pallas_src>
import jax
import jax.numpy as jnp
from jax.experimental import pallas as pl
from jax.experimental.pallas import tpu as pltpu

NUM_USERS = 1575
NUM_ITEMS = 5754
EMBED_DIM = 32
DEEP_LAYERS = [64, 32]


def neural_fm_kernel(
    ue_ref,     # (D, T)   user embeddings, batch on lanes
    ie_ref,     # (D, T)   item embeddings, batch on lanes
    wfm_ref,    # (2D, 1)  fm_layer weight column ([user half; item half])
    w1_ref,     # (64, D)  dnn[0].weight (PyTorch (out, in) layout)
    b1_ref,     # (64, 1)
    w2_ref,     # (32, 64) dnn[2].weight
    b2_ref,     # (32, 1)
    w3_ref,     # (32, 1)  dnn[4].weight column
    bias0_ref,  # (1, 1)   SMEM scalar: fm bias + final deep bias
    out_ref,    # (1, T)   sigmoid scores, lane-dense
):
    ue = ue_ref[...]                      # (D, T)
    ie = ie_ref[...]                      # (D, T)
    d = ue.shape[0]

    # FM part: Linear(concat([ue, ie]))  ==  sum_d(wu*ue + wi*ie)  -> (1, T)
    # (VPU multiply + XLU sublane reduction; keeps the N=1 dot off the MXU.)
    wu = wfm_ref[0:d, :]                  # (D, 1)
    wi = wfm_ref[d:2 * d, :]              # (D, 1)
    fm = jnp.sum(wu * ue + wi * ie, axis=0, keepdims=True)          # (1, T)

    # Deep part on the elementwise interaction (batch stays on lanes throughout).
    inter = ue * ie                                                  # (D, T)
    h = jnp.dot(w1_ref[...], inter, preferred_element_type=jnp.float32) + b1_ref[...]
    h = jnp.maximum(h, 0.0)                                          # (64, T)
    h = jnp.dot(w2_ref[...], h, preferred_element_type=jnp.float32) + b2_ref[...]
    h = jnp.maximum(h, 0.0)                                          # (32, T)
    deep = jnp.sum(w3_ref[...] * h, axis=0, keepdims=True)           # (1, T)

    z = fm + deep + bias0_ref[0, 0]
    out_ref[...] = jax.nn.sigmoid(z)


def neural_fm_forward(user, item, params, tile_b=1024):
    """user, item: int32 index vectors of shape (B,). Returns sigmoid scores (B,)."""
    D = params["user_emb"].shape[1]
    B = int(user.shape[0])

    # Pad batch to a lane multiple, then to a multiple of the tile.
    bp = ((B + 127) // 128) * 128
    tb = min(tile_b, bp)
    bp = ((bp + tb - 1) // tb) * tb
    num_tiles = bp // tb

    pad = bp - B
    user_p = jnp.pad(user, (0, pad))
    item_p = jnp.pad(item, (0, pad))

    # Glue: embedding gather (XLA), then present a lane-dense (D, bp) slab to the kernel.
    ue_t = jnp.take(params["user_emb"], user_p, axis=0).T            # (D, bp)
    ie_t = jnp.take(params["item_emb"], item_p, axis=0).T            # (D, bp)

    bias0 = (params["bfm"] + params["b3"]).reshape(1, 1)             # combined scalar bias

    const = lambda i: (0, 0)  # weights: resident across grid steps (no re-DMA)

    out = pl.pallas_call(
        neural_fm_kernel,
        out_shape=jax.ShapeDtypeStruct((1, bp), jnp.float32),
        grid=(num_tiles,),
        in_specs=[
            pl.BlockSpec((D, tb), lambda i: (0, i)),                 # ue_t tile
            pl.BlockSpec((D, tb), lambda i: (0, i)),                 # ie_t tile
            pl.BlockSpec((2 * D, 1), const),                         # wfm
            pl.BlockSpec((DEEP_LAYERS[0], D), const),                # w1
            pl.BlockSpec((DEEP_LAYERS[0], 1), const),                # b1
            pl.BlockSpec((DEEP_LAYERS[1], DEEP_LAYERS[0]), const),   # w2
            pl.BlockSpec((DEEP_LAYERS[1], 1), const),                # b2
            pl.BlockSpec((DEEP_LAYERS[1], 1), const),                # w3
            pl.BlockSpec((1, 1), const,
                         memory_space=pltpu.MemorySpace.SMEM),       # scalar bias
        ],
        out_specs=pl.BlockSpec((1, tb), lambda i: (0, i)),           # lane-dense output
        compiler_params=pltpu.CompilerParams(
            dimension_semantics=("parallel",)),
    )(ue_t, ie_t,
      params["wfm"], params["w1"], params["b1"],
      params["w2"], params["b2"], params["w3"], bias0)

    # (1, bp) -> (B,)  (matches torch .squeeze() on (B, 1))
    return out.reshape(bp)[:B]


def init_params(key):
    ks = jax.random.split(key, 10)
    D = EMBED_DIM
    return {
        "user_emb": jax.random.normal(ks[0], (NUM_USERS, D), jnp.float32) * 0.1,
        "item_emb": jax.random.normal(ks[1], (NUM_ITEMS, D), jnp.float32) * 0.1,
        # fm_layer: Linear(2D -> 1); stored as weight^T (2D, 1)
        "wfm": jax.random.normal(ks[2], (2 * D, 1), jnp.float32) * 0.1,
        "bfm": jax.random.normal(ks[3], (1, 1), jnp.float32) * 0.1,
        # dnn: Linear(D->64) / ReLU / Linear(64->32) / ReLU / Linear(32->1)
        # weights kept in PyTorch (out, in) layout; biases as (out, 1) columns.
        "w1": jax.random.normal(ks[4], (DEEP_LAYERS[0], D), jnp.float32) * 0.1,
        "b1": jax.random.normal(ks[5], (DEEP_LAYERS[0], 1), jnp.float32) * 0.1,
        "w2": jax.random.normal(ks[6], (DEEP_LAYERS[1], DEEP_LAYERS[0]), jnp.float32) * 0.1,
        "b2": jax.random.normal(ks[7], (DEEP_LAYERS[1], 1), jnp.float32) * 0.1,
        "w3": jax.random.normal(ks[8], (DEEP_LAYERS[1], 1), jnp.float32) * 0.1,
        "b3": jax.random.normal(ks[9], (1, 1), jnp.float32) * 0.1,
    }


def neural_fm_reference(user, item, p):
    """Plain-JAX reference matching the PyTorch forward exactly."""
    ue = jnp.take(p["user_emb"], user, axis=0)                       # (B, D)
    ie = jnp.take(p["item_emb"], item, axis=0)                       # (B, D)
    fm_in = jnp.concatenate([ue, ie], axis=1)                        # (B, 2D)
    fm_out = fm_in @ p["wfm"] + p["bfm"]                             # (B, 1)
    inter = ue * ie
    h = jnp.maximum(inter @ p["w1"].T + p["b1"].T, 0.0)
    h = jnp.maximum(h @ p["w2"].T + p["b2"].T, 0.0)
    deep = h @ p["w3"] + p["b3"]
    return jax.nn.sigmoid(fm_out + deep).squeeze(-1)


if __name__ == "__main__":
    key = jax.random.PRNGKey(0)
    params = init_params(key)

    B = 8
    ku, ki = jax.random.split(jax.random.PRNGKey(1))
    user = jax.random.randint(ku, (B,), 0, NUM_USERS, dtype=jnp.int32)
    item = jax.random.randint(ki, (B,), 0, NUM_ITEMS, dtype=jnp.int32)

    out = jax.block_until_ready(neural_fm_forward(user, item, params))
    ref = jax.block_until_ready(neural_fm_reference(user, item, params))

    assert out.shape == (B,), out.shape
    assert jnp.allclose(out, ref, atol=1e-5, rtol=1e-5), (out, ref)

    print("KERNEL_OK")
</pallas_src>

<mosaic_0001>
module attributes {stable_mosaic.version = 11 : i64} {
  func.func @neural_fm_kernel(%arg0: i32, %arg1: memref<32x128xf32, #tpu.memory_space<vmem>>, %arg2: memref<32x128xf32, #tpu.memory_space<vmem>>, %arg3: memref<64x1xf32, #tpu.memory_space<vmem>>, %arg4: memref<64x32xf32, #tpu.memory_space<vmem>>, %arg5: memref<64x1xf32, #tpu.memory_space<vmem>>, %arg6: memref<32x64xf32, #tpu.memory_space<vmem>>, %arg7: memref<32x1xf32, #tpu.memory_space<vmem>>, %arg8: memref<32x1xf32, #tpu.memory_space<vmem>>, %arg9: memref<1x1xf32, #tpu.memory_space<smem>>, %arg10: memref<1x128xf32, #tpu.memory_space<vmem>>) attributes {dimension_semantics = [#tpu.dimension_semantics<parallel>], iteration_bounds = array<i64: 1>, scalar_prefetch = 0 : i64, scratch_operands = 0 : i64, tpu.core_type = #tpu.core_type<tc>, window_params = [{transform_indices = @transform_0, window_bounds = array<i64: 32, 128>}, {transform_indices = @transform_1, window_bounds = array<i64: 32, 128>}, {pipeline_mode = #tpu.pipeline_mode<synchronous>, transform_indices = @transform_2, window_bounds = array<i64: 64, 1>}, {pipeline_mode = #tpu.pipeline_mode<synchronous>, transform_indices = @transform_3, window_bounds = array<i64: 64, 32>}, {pipeline_mode = #tpu.pipeline_mode<synchronous>, transform_indices = @transform_4, window_bounds = array<i64: 64, 1>}, {pipeline_mode = #tpu.pipeline_mode<synchronous>, transform_indices = @transform_5, window_bounds = array<i64: 32, 64>}, {pipeline_mode = #tpu.pipeline_mode<synchronous>, transform_indices = @transform_6, window_bounds = array<i64: 32, 1>}, {pipeline_mode = #tpu.pipeline_mode<synchronous>, transform_indices = @transform_7, window_bounds = array<i64: 32, 1>}, {transform_indices = @transform_8, window_bounds = array<i64: 1, 1>}, {transform_indices = @transform_9, window_bounds = array<i64: 1, 128>}]} {
    %c0 = arith.constant 0 : index
    %c0_0 = arith.constant 0 : index
    %0 = vector.load %arg1[%c0, %c0_0] : memref<32x128xf32, #tpu.memory_space<vmem>>, vector<32x128xf32>
    %c0_1 = arith.constant 0 : index
    %c0_2 = arith.constant 0 : index
    %1 = vector.load %arg2[%c0_1, %c0_2] : memref<32x128xf32, #tpu.memory_space<vmem>>, vector<32x128xf32>
    %c0_3 = arith.constant 0 : index
    %c0_4 = arith.constant 0 : index
    %2 = vector.load %arg3[%c0_3, %c0_4] : memref<64x1xf32, #tpu.memory_space<vmem>>, vector<32x1xf32>
    %c32 = arith.constant 32 : index
    %c0_5 = arith.constant 0 : index
    %3 = vector.load %arg3[%c32, %c0_5] : memref<64x1xf32, #tpu.memory_space<vmem>>, vector<32x1xf32>
    %4 = vector.broadcast %2 : vector<32x1xf32> to vector<32x128xf32>
    %5 = arith.mulf %4, %0 : vector<32x128xf32>
    %6 = vector.broadcast %3 : vector<32x1xf32> to vector<32x128xf32>
    %7 = arith.mulf %6, %1 : vector<32x128xf32>
    %8 = arith.addf %5, %7 : vector<32x128xf32>
    %cst = arith.constant dense<0.000000e+00> : vector<128xf32>
    %9 = vector.multi_reduction <add>, %8, %cst [0] : vector<32x128xf32> to vector<128xf32>
    %10 = vector.shape_cast %9 : vector<128xf32> to vector<1x128xf32>
    %11 = arith.mulf %0, %1 : vector<32x128xf32>
    %c0_6 = arith.constant 0 : index
    %c0_7 = arith.constant 0 : index
    %12 = vector.load %arg4[%c0_6, %c0_7] : memref<64x32xf32, #tpu.memory_space<vmem>>, vector<64x32xf32>
    %cst_8 = arith.constant dense<0.000000e+00> : vector<64x128xf32>
    %13 = tpu.matmul %12, %11, %cst_8 {dimension_numbers = #tpu.dot_dimension_numbers<[1], [0], [0], [1], [0, 0, 1, 1], [], []>} : vector<64x32xf32>, vector<32x128xf32>, vector<64x128xf32> -> vector<64x128xf32>
    %c0_9 = arith.constant 0 : index
    %c0_10 = arith.constant 0 : index
    %14 = vector.load %arg5[%c0_9, %c0_10] : memref<64x1xf32, #tpu.memory_space<vmem>>, vector<64x1xf32>
    %15 = vector.broadcast %14 : vector<64x1xf32> to vector<64x128xf32>
    %16 = arith.addf %13, %15 : vector<64x128xf32>
    %cst_11 = arith.constant 0.000000e+00 : f32
    %17 = vector.broadcast %cst_11 : f32 to vector<64x128xf32>
    %18 = arith.maximumf %16, %17 : vector<64x128xf32>
    %c0_12 = arith.constant 0 : index
    %c0_13 = arith.constant 0 : index
    %19 = vector.load %arg6[%c0_12, %c0_13] : memref<32x64xf32, #tpu.memory_space<vmem>>, vector<32x64xf32>
    %cst_14 = arith.constant dense<0.000000e+00> : vector<32x128xf32>
    %20 = tpu.matmul %19, %18, %cst_14 {dimension_numbers = #tpu.dot_dimension_numbers<[1], [0], [0], [1], [0, 0, 1, 1], [], []>} : vector<32x64xf32>, vector<64x128xf32>, vector<32x128xf32> -> vector<32x128xf32>
    %c0_15 = arith.constant 0 : index
    %c0_16 = arith.constant 0 : index
    %21 = vector.load %arg7[%c0_15, %c0_16] : memref<32x1xf32, #tpu.memory_space<vmem>>, vector<32x1xf32>
    %22 = vector.broadcast %21 : vector<32x1xf32> to vector<32x128xf32>
    %23 = arith.addf %20, %22 : vector<32x128xf32>
    %cst_17 = arith.constant 0.000000e+00 : f32
    %24 = vector.broadcast %cst_17 : f32 to vector<32x128xf32>
    %25 = arith.maximumf %23, %24 : vector<32x128xf32>
    %c0_18 = arith.constant 0 : index
    %c0_19 = arith.constant 0 : index
    %26 = vector.load %arg8[%c0_18, %c0_19] : memref<32x1xf32, #tpu.memory_space<vmem>>, vector<32x1xf32>
    %27 = vector.broadcast %26 : vector<32x1xf32> to vector<32x128xf32>
    %28 = arith.mulf %27, %25 : vector<32x128xf32>
    %cst_20 = arith.constant dense<0.000000e+00> : vector<128xf32>
    %29 = vector.multi_reduction <add>, %28, %cst_20 [0] : vector<32x128xf32> to vector<128xf32>
    %30 = vector.shape_cast %29 : vector<128xf32> to vector<1x128xf32>
    %31 = arith.addf %10, %30 : vector<1x128xf32>
    %c0_21 = arith.constant 0 : index
    %c0_22 = arith.constant 0 : index
    %32 = memref.load %arg9[%c0_21, %c0_22] : memref<1x1xf32, #tpu.memory_space<smem>>
    %33 = vector.broadcast %32 : f32 to vector<1x128xf32>
    %34 = arith.addf %31, %33 : vector<1x128xf32>
    %35 = arith.negf %34 : vector<1x128xf32>
    %36 = math.exp %35 : vector<1x128xf32>
    %cst_23 = arith.constant 1.000000e+00 : f32
    %37 = vector.broadcast %cst_23 : f32 to vector<1x128xf32>
    %38 = arith.addf %37, %36 : vector<1x128xf32>
    %39 = arith.divf %37, %38 : vector<1x128xf32>
    %c0_24 = arith.constant 0 : index
    %c0_25 = arith.constant 0 : index
    %40 = vector.load %arg10[%c0_24, %c0_25] : memref<1x128xf32, #tpu.memory_space<vmem>>, vector<1x128xf32>
    tpu.vector_store %arg10[%c0_24, %c0_25], %39 {strides = array<i32>} : memref<1x128xf32, #tpu.memory_space<vmem>>, vector<1x128xf32>,
    return
  }
  func.func @transform_0(%arg0: i32) -> (i32, i32) {
    %c0_i32 = arith.constant 0 : i32
    %c0_i32_0 = arith.constant 0 : i32
    return %c0_i32, %arg0 : i32, i32
  }
  func.func @transform_1(%arg0: i32) -> (i32, i32) {
    %c0_i32 = arith.constant 0 : i32
    %c0_i32_0 = arith.constant 0 : i32
    return %c0_i32, %arg0 : i32, i32
  }
  func.func @transform_2(%arg0: i32) -> (i32, i32) {
    %c0_i32 = arith.constant 0 : i32
    %c0_i32_0 = arith.constant 0 : i32
    %c0_i32_1 = arith.constant 0 : i32
    return %c0_i32, %c0_i32_0 : i32, i32
  }
  func.func @transform_3(%arg0: i32) -> (i32, i32) {
    %c0_i32 = arith.constant 0 : i32
    %c0_i32_0 = arith.constant 0 : i32
    %c0_i32_1 = arith.constant 0 : i32
    return %c0_i32, %c0_i32_0 : i32, i32
  }
  func.func @transform_4(%arg0: i32) -> (i32, i32) {
    %c0_i32 = arith.constant 0 : i32
    %c0_i32_0 = arith.constant 0 : i32
    %c0_i32_1 = arith.constant 0 : i32
    return %c0_i32, %c0_i32_0 : i32, i32
  }
  func.func @transform_5(%arg0: i32) -> (i32, i32) {
    %c0_i32 = arith.constant 0 : i32
    %c0_i32_0 = arith.constant 0 : i32
    %c0_i32_1 = arith.constant 0 : i32
    return %c0_i32, %c0_i32_0 : i32, i32
  }
  func.func @transform_6(%arg0: i32) -> (i32, i32) {
    %c0_i32 = arith.constant 0 : i32
    %c0_i32_0 = arith.constant 0 : i32
    %c0_i32_1 = arith.constant 0 : i32
    return %c0_i32, %c0_i32_0 : i32, i32
  }
  func.func @transform_7(%arg0: i32) -> (i32, i32) {
    %c0_i32 = arith.constant 0 : i32
    %c0_i32_0 = arith.constant 0 : i32
    %c0_i32_1 = arith.constant 0 : i32
    return %c0_i32, %c0_i32_0 : i32, i32
  }
  func.func @transform_8(%arg0: i32) -> (i32, i32) {
    %c0_i32 = arith.constant 0 : i32
    %c0_i32_0 = arith.constant 0 : i32
    %c0_i32_1 = arith.constant 0 : i32
    return %c0_i32, %c0_i32_0 : i32, i32
  }
  func.func @transform_9(%arg0: i32) -> (i32, i32) {
    %c0_i32 = arith.constant 0 : i32
    %c0_i32_0 = arith.constant 0 : i32
    return %c0_i32, %arg0 : i32, i32
  }
}

</mosaic_0001>

<llo_original>
// kernel: tpu_custom_call.1
$region0: #{tpu_custom_call.1}
  #allocation0 [shape = 'u32[]', space=smem, size = 0x4, offset = 0x4, fixed_abs, tag = 'smem constant byte address 0x4 - core index']
  #allocation1 [shape = 'u32[72,128]{1,0:T(1,128)}', space=vmem, size = 0x9000, scoped, tag = 'internal scratch']
  #allocation2 [shape = 'f32[1,1]{1,0:T(1,128)S(6)}', space=smem, size = 0x200, scoped, tag = 'scoped memory for tpu_custom_call.1']
  %s0 = inlined_call_operand.vmem [shape: f32[32,128], index: 0, kind: input, shape index: {}]
  %s1 = inlined_call_operand.vmem [shape: f32[32,128], index: 1, kind: input, shape index: {}]
  %s2 = inlined_call_operand.vmem [shape: f32[64,1], index: 2, kind: input, shape index: {}]
  %s3 = inlined_call_operand.vmem [shape: f32[64,32], index: 3, kind: input, shape index: {}]
  %s4 = inlined_call_operand.vmem [shape: f32[64,1], index: 4, kind: input, shape index: {}]
  %s5 = inlined_call_operand.vmem [shape: f32[32,64], index: 5, kind: input, shape index: {}]
  %s6 = inlined_call_operand.vmem [shape: f32[32,1], index: 6, kind: input, shape index: {}]
  %s7 = inlined_call_operand.vmem [shape: f32[32,1], index: 7, kind: input, shape index: {}]
  %s8 = inlined_call_operand.<no memory space> [shape: f32[1,1], index: 8, kind: input, shape index: {}]
  %s9 = inlined_call_operand.hbm [shape: f32[1,128], index: 9, kind: output, shape index: {}]
  %s10 = sld [smem:[#allocation0]]
  $region46: #{tpu_custom_call.1} parent=0
    _
  %s12 = ssub.s32 1, %s10
  %s13 = scalar_select 0, %s12, %s10
  %14 = sst [smem:[#allocation2]] %s8
  $region1: #{tpu_custom_call.1} parent=0
    #allocation3 [shape = 'u8[512]{0}', space=vmem, size = 0x400, scoped, tag = 'output window, operand 0, single buffered']
    #allocation4 [shape = 's32[1]{0}', space=sflag, size = 0x4, scoped, tag = 'scoped memory for tpu_custom_call.1']
    %15 = vsyncpa [#allocation4], 0
    // Predicated region
    $region2: #{tpu_custom_call.1} parent=1 // pred_check
      _
    $region3: #{tpu_custom_call.1} parent=1 // pred_check_branch
      %17 = sbr.rel (0) target = $region5
    $region4: #{tpu_custom_call.1} parent=1 // pred_region
      _
    $region5: #{tpu_custom_call.1} parent=1 // pred_fallthru
      _
    // Predicated region
    $region6: #{tpu_custom_call.1} parent=1 // pred_check
      _
    $region7: #{tpu_custom_call.1} parent=1 // pred_check_branch
      %19 = sbr.rel (0) target = $region9
    $region8: #{tpu_custom_call.1} parent=1 // pred_region
      _
    $region9: #{tpu_custom_call.1} parent=1 // pred_fallthru
      _
    // Predicated region
    $region10: #{tpu_custom_call.1} parent=1 // pred_check
      _
    $region11: #{tpu_custom_call.1} parent=1 // pred_check_branch
      %21 = sbr.rel (0) target = $region13
    $region12: #{tpu_custom_call.1} parent=1 // pred_region
      _
    $region13: #{tpu_custom_call.1} parent=1 // pred_fallthru
      _
    // Predicated region
    $region14: #{tpu_custom_call.1} parent=1 // pred_check
      _
    $region15: #{tpu_custom_call.1} parent=1 // pred_check_branch
      %23 = sbr.rel (0) target = $region17
    $region16: #{tpu_custom_call.1} parent=1 // pred_region
      _
    $region17: #{tpu_custom_call.1} parent=1 // pred_fallthru
      _
    // Predicated region
    $region18: #{tpu_custom_call.1} parent=1 // pred_check
      _
    $region19: #{tpu_custom_call.1} parent=1 // pred_check_branch
      %25 = sbr.rel (0) target = $region21
    $region20: #{tpu_custom_call.1} parent=1 // pred_region
      _
    $region21: #{tpu_custom_call.1} parent=1 // pred_fallthru
      _
    // Predicated region
    $region22: #{tpu_custom_call.1} parent=1 // pred_check
      _
    $region23: #{tpu_custom_call.1} parent=1 // pred_check_branch
      %27 = sbr.rel (0) target = $region25
    $region24: #{tpu_custom_call.1} parent=1 // pred_region
      _
    $region25: #{tpu_custom_call.1} parent=1 // pred_fallthru
      _
    // Predicated region
    $region26: #{tpu_custom_call.1} parent=1 // pred_check
      _
    $region27: #{tpu_custom_call.1} parent=1 // pred_check_branch
      %29 = sbr.rel (0) target = $region29
    $region28: #{tpu_custom_call.1} parent=1 // pred_region
      _
    $region29: #{tpu_custom_call.1} parent=1 // pred_fallthru
      _
    // Predicated region
    $region30: #{tpu_custom_call.1} parent=1 // pred_check
      _
    $region31: #{tpu_custom_call.1} parent=1 // pred_check_branch
      %31 = sbr.rel (0) target = $region33
    $region32: #{tpu_custom_call.1} parent=1 // pred_region
      _
    $region33: #{tpu_custom_call.1} parent=1 // pred_fallthru
      _
    // Predicated region
    $region34: #{tpu_custom_call.1} parent=1 // pred_check
      _
    $region35: #{tpu_custom_call.1} parent=1 // pred_check_branch
      %33 = sbr.rel (0) target = $region37
    $region36: #{tpu_custom_call.1} parent=1 // pred_region
      _
    $region37: #{tpu_custom_call.1} parent=1 // pred_fallthru
      _
    %v34 = vld [vmem:[%s0] sm:$0xff]
    %v35 = vld [vmem:[%s0 + $0x8] sm:$0xff]
    %v36 = vld [vmem:[%s0 + $0x10] sm:$0xff]
    %v37 = vld [vmem:[%s0 + $0x18] sm:$0xff]
    %v38 = vld [vmem:[%s1] sm:$0xff]
    %v39 = vld [vmem:[%s1 + $0x8] sm:$0xff]
    %v40 = vld [vmem:[%s1 + $0x10] sm:$0xff]
    %v41 = vld [vmem:[%s1 + $0x18] sm:$0xff]
    %v42 = vld [vmem:[%s2] sm:$0xff]
    %v43 = vld [vmem:[%s2 + $0x8] sm:$0xff]
    %v44 = vld [vmem:[%s2 + $0x10] sm:$0xff]
    %v45 = vld [vmem:[%s2 + $0x18] sm:$0xff]
    %v46 = vld [vmem:[%s2 + $0x20] sm:$0xff]
    %v47 = vld [vmem:[%s2 + $0x28] sm:$0xff]
    %v48 = vld [vmem:[%s2 + $0x30] sm:$0xff]
    %v49 = vld [vmem:[%s2 + $0x38] sm:$0xff]
    %51 = vset.pattern.permute.xlu0 0
    %52 = vperm.xlu0 %51, %v42
    %v53 = vpop.permute.xlu0 %52
    %56 = vset.pattern.permute.xlu0 0
    %57 = vperm.xlu0 %56, %v43
    %v58 = vpop.permute.xlu0 %57
    %61 = vset.pattern.permute.xlu0 0
    %62 = vperm.xlu0 %61, %v44
    %v63 = vpop.permute.xlu0 %62
    %66 = vset.pattern.permute.xlu0 0
    %67 = vperm.xlu0 %66, %v45
    %v68 = vpop.permute.xlu0 %67
    %v70 = vmul.f32 %v53, %v34
    %v71 = vmul.f32 %v58, %v35
    %v72 = vmul.f32 %v63, %v36
    %v73 = vmul.f32 %v68, %v37
    %75 = vset.pattern.permute.xlu0 0
    %76 = vperm.xlu0 %75, %v46
    %v77 = vpop.permute.xlu0 %76
    %80 = vset.pattern.permute.xlu0 0
    %81 = vperm.xlu0 %80, %v47
    %v82 = vpop.permute.xlu0 %81
    %85 = vset.pattern.permute.xlu0 0
    %86 = vperm.xlu0 %85, %v48
    %v87 = vpop.permute.xlu0 %86
    %90 = vset.pattern.permute.xlu0 0
    %91 = vperm.xlu0 %90, %v49
    %v92 = vpop.permute.xlu0 %91
    %v94 = vmul.f32 %v77, %v38
    %v95 = vmul.f32 %v82, %v39
    %v96 = vmul.f32 %v87, %v40
    %v97 = vmul.f32 %v92, %v41
    %v98 = vadd.f32 %v70, %v94
    %v99 = vadd.f32 %v71, %v95
    %v100 = vadd.f32 %v72, %v96
    %v101 = vadd.f32 %v73, %v97
    %v102 = vadd.f32 %v98, %v99
    %v103 = vadd.f32 %v102, %v100
    %v104 = vadd.f32 %v103, %v101
    %v105 = vrot.slane %v104, 4
    %v106 = vadd.f32 %v104, %v105
    %v107 = vrot.slane %v106, 2
    %v108 = vadd.f32 %v106, %v107
    %v109 = vrot.slane %v108, 1
    %v110 = vadd.f32 %v108, %v109
    %v111 = vmul.f32 %v34, %v38
    %v112 = vmul.f32 %v35, %v39
    %v113 = vmul.f32 %v36, %v40
    %v114 = vmul.f32 %v37, %v41
    %v115 = vld [vmem:[%s3] sm:$0xff]
    %v116 = vld [vmem:[%s3 + $0x8] sm:$0xff]
    %v117 = vld [vmem:[%s3 + $0x10] sm:$0xff]
    %v118 = vld [vmem:[%s3 + $0x18] sm:$0xff]
    %v119 = vld [vmem:[%s3 + $0x20] sm:$0xff]
    %v120 = vld [vmem:[%s3 + $0x28] sm:$0xff]
    %v121 = vld [vmem:[%s3 + $0x30] sm:$0xff]
    %v122 = vld [vmem:[%s3 + $0x38] sm:$0xff]
    %v123 = vld [vmem:[%s4] sm:$0xff]
    %v124 = vld [vmem:[%s4 + $0x8] sm:$0xff]
    %v125 = vld [vmem:[%s4 + $0x10] sm:$0xff]
    %v126 = vld [vmem:[%s4 + $0x18] sm:$0xff]
    %v127 = vld [vmem:[%s4 + $0x20] sm:$0xff]
    %v128 = vld [vmem:[%s4 + $0x28] sm:$0xff]
    %v129 = vld [vmem:[%s4 + $0x30] sm:$0xff]
    %v130 = vld [vmem:[%s4 + $0x38] sm:$0xff]
    %132 = vset.pattern.permute.xlu0 0
    %133 = vperm.xlu0 %132, %v123
    %v134 = vpop.permute.xlu0 %133
    %137 = vset.pattern.permute.xlu0 0
    %138 = vperm.xlu0 %137, %v124
    %v139 = vpop.permute.xlu0 %138
    %142 = vset.pattern.permute.xlu0 0
    %143 = vperm.xlu0 %142, %v125
    %v144 = vpop.permute.xlu0 %143
    %147 = vset.pattern.permute.xlu0 0
    %148 = vperm.xlu0 %147, %v126
    %v149 = vpop.permute.xlu0 %148
    %152 = vset.pattern.permute.xlu0 0
    %153 = vperm.xlu0 %152, %v127
    %v154 = vpop.permute.xlu0 %153
    %157 = vset.pattern.permute.xlu0 0
    %158 = vperm.xlu0 %157, %v128
    %v159 = vpop.permute.xlu0 %158
    %162 = vset.pattern.permute.xlu0 0
    %163 = vperm.xlu0 %162, %v129
    %v164 = vpop.permute.xlu0 %163
    %167 = vset.pattern.permute.xlu0 0
    %168 = vperm.xlu0 %167, %v130
    %v169 = vpop.permute.xlu0 %168
    %vm171 = vcmask 261120
    %v173 = vsel %vm171, %v115, 0
    %v176 = vsel %vm171, %v116, 0
    %v179 = vsel %vm171, %v117, 0
    %v182 = vsel %vm171, %v118, 0
    %v185 = vsel %vm171, %v119, 0
    %v188 = vsel %vm171, %v120, 0
    %v191 = vsel %vm171, %v121, 0
    %v194 = vsel %vm171, %v122, 0
    %196 = vmatpush.msra.mxu0 0.0
    %197 = vmatpush.msra.mxu0 0.0
    %198 = vmatpush.msra.mxu0 0.0
    %199 = vmatpush.msra.mxu0 0.0
    %200 = vmatpush.msra.mxu0 0.0
    %201 = vmatpush.msra.mxu0 0.0
    %202 = vmatpush.msra.mxu0 0.0
    %203 = vmatpush.msra.mxu0 0.0
    %204 = vmatpush.msra.mxu0 0.0
    %205 = vmatpush.msra.mxu0 0.0
    %206 = vmatpush.msra.mxu0 0.0
    %207 = vmatpush.msra.mxu0 0.0
    %208 = vmatpush.msra.mxu0 %v114
    %209 = vmatpush.msra.mxu0 %v113
    %210 = vmatpush.msra.mxu0 %v112
    %211 = vmatpush.msra.mxu0 %v111
    %212 = vmatmul.f32.gmra.mxu0 %v173
    %v213 = vpop.f32.mrf.mxu0
    %v214 = vadd.f32 %v134, %v213
    %215 = vmatmul.f32.gmra.mxu0 %v176
    %v216 = vpop.f32.mrf.mxu0
    %v217 = vadd.f32 %v139, %v216
    %218 = vmatmul.f32.gmra.mxu0 %v179
    %v219 = vpop.f32.mrf.mxu0
    %v220 = vadd.f32 %v144, %v219
    %221 = vmatmul.f32.gmra.mxu0 %v182
    %v222 = vpop.f32.mrf.mxu0
    %v223 = vadd.f32 %v149, %v222
    %224 = vmatmul.f32.gmra.mxu0 %v185
    %v225 = vpop.f32.mrf.mxu0
    %v226 = vadd.f32 %v154, %v225
    %227 = vmatmul.f32.gmra.mxu0 %v188
    %v228 = vpop.f32.mrf.mxu0
    %v229 = vadd.f32 %v159, %v228
    %230 = vmatmul.f32.gmra.mxu0 %v191
    %v231 = vpop.f32.mrf.mxu0
    %v232 = vadd.f32 %v164, %v231
    %233 = vmatmul.f32.gmra.mxu0 %v194
    %v234 = vpop.f32.mrf.mxu0
    %v235 = vadd.f32 %v169, %v234
    %236 = vdwg.mxu0
    %v237 = vmax.f32 %v214, 0.0
    %v238 = vmax.f32 %v217, 0.0
    %v239 = vmax.f32 %v220, 0.0
    %v240 = vmax.f32 %v223, 0.0
    %v241 = vmax.f32 %v226, 0.0
    %v242 = vmax.f32 %v229, 0.0
    %v243 = vmax.f32 %v232, 0.0
    %v244 = vmax.f32 %v235, 0.0
    %v245 = vld [vmem:[%s5] sm:$0xff]
    %v246 = vld [vmem:[%s5 + $0x8] sm:$0xff]
    %v247 = vld [vmem:[%s5 + $0x10] sm:$0xff]
    %v248 = vld [vmem:[%s5 + $0x18] sm:$0xff]
    %v249 = vld [vmem:[%s6] sm:$0xff]
    %v250 = vld [vmem:[%s6 + $0x8] sm:$0xff]
    %v251 = vld [vmem:[%s6 + $0x10] sm:$0xff]
    %v252 = vld [vmem:[%s6 + $0x18] sm:$0xff]
    %254 = vset.pattern.permute.xlu0 0
    %255 = vperm.xlu0 %254, %v249
    %v256 = vpop.permute.xlu0 %255
    %259 = vset.pattern.permute.xlu0 0
    %260 = vperm.xlu0 %259, %v250
    %v261 = vpop.permute.xlu0 %260
    %264 = vset.pattern.permute.xlu0 0
    %265 = vperm.xlu0 %264, %v251
    %v266 = vpop.permute.xlu0 %265
    %269 = vset.pattern.permute.xlu0 0
    %270 = vperm.xlu0 %269, %v252
    %v271 = vpop.permute.xlu0 %270
    %vm273 = vcmask 523264
    %v275 = vsel %vm273, %v245, 0
    %v278 = vsel %vm273, %v246, 0
    %v281 = vsel %vm273, %v247, 0
    %v284 = vsel %vm273, %v248, 0
    %286 = vmatpush.msra.mxu0 0.0
    %287 = vmatpush.msra.mxu0 0.0
    %288 = vmatpush.msra.mxu0 0.0
    %289 = vmatpush.msra.mxu0 0.0
    %290 = vmatpush.msra.mxu0 0.0
    %291 = vmatpush.msra.mxu0 0.0
    %292 = vmatpush.msra.mxu0 0.0
    %293 = vmatpush.msra.mxu0 0.0
    %294 = vmatpush.msra.mxu0 %v244
    %295 = vmatpush.msra.mxu0 %v243
    %296 = vmatpush.msra.mxu0 %v242
    %297 = vmatpush.msra.mxu0 %v241
    %298 = vmatpush.msra.mxu0 %v240
    %299 = vmatpush.msra.mxu0 %v239
    %300 = vmatpush.msra.mxu0 %v238
    %301 = vmatpush.msra.mxu0 %v237
    %302 = vmatmul.f32.gmra.mxu0 %v275
    %v303 = vpop.f32.mrf.mxu0
    %v304 = vadd.f32 %v256, %v303
    %305 = vmatmul.f32.gmra.mxu0 %v278
    %v306 = vpop.f32.mrf.mxu0
    %v307 = vadd.f32 %v261, %v306
    %308 = vmatmul.f32.gmra.mxu0 %v281
    %v309 = vpop.f32.mrf.mxu0
    %v310 = vadd.f32 %v266, %v309
    %311 = vmatmul.f32.gmra.mxu0 %v284
    %v312 = vpop.f32.mrf.mxu0
    %v313 = vadd.f32 %v271, %v312
    %314 = vdwg.mxu0
    %v315 = vmax.f32 %v304, 0.0
    %v316 = vmax.f32 %v307, 0.0
    %v317 = vmax.f32 %v310, 0.0
    %v318 = vmax.f32 %v313, 0.0
    %v319 = vld [vmem:[%s7] sm:$0xff]
    %v320 = vld [vmem:[%s7 + $0x8] sm:$0xff]
    %v321 = vld [vmem:[%s7 + $0x10] sm:$0xff]
    %v322 = vld [vmem:[%s7 + $0x18] sm:$0xff]
    %324 = vset.pattern.permute.xlu0 0
    %325 = vperm.xlu0 %324, %v319
    %v326 = vpop.permute.xlu0 %325
    %329 = vset.pattern.permute.xlu0 0
    %330 = vperm.xlu0 %329, %v320
    %v331 = vpop.permute.xlu0 %330
    %334 = vset.pattern.permute.xlu0 0
    %335 = vperm.xlu0 %334, %v321
    %v336 = vpop.permute.xlu0 %335
    %339 = vset.pattern.permute.xlu0 0
    %340 = vperm.xlu0 %339, %v322
    %v341 = vpop.permute.xlu0 %340
    %v343 = vmul.f32 %v326, %v315
    %v344 = vmul.f32 %v331, %v316
    %v345 = vmul.f32 %v336, %v317
    %v346 = vmul.f32 %v341, %v318
    %v347 = vadd.f32 %v343, %v344
    %v348 = vadd.f32 %v347, %v345
    %v349 = vadd.f32 %v348, %v346
    %v350 = vrot.slane %v349, 4
    %v351 = vadd.f32 %v349, %v350
    %v352 = vrot.slane %v351, 2
    %v353 = vadd.f32 %v351, %v352
    %v354 = vrot.slane %v353, 1
    %v355 = vadd.f32 %v353, %v354
    %v356 = vadd.f32 %v110, %v355
    %s357 = sld [smem:[#allocation2]]
    %v358 = vstv %s357
    %v359 = vadd.f32 %v356, %v358
    %v360 = vxor.u32 %v359, 2147483648
    %v361 = vmul.f32 %v360, 1.442695
    %v362 = vpow.pop %v361
    %v363 = vadd.f32 %v362, 1.0
    %v364 = vrcp.pop %v363
    %v365 = vmul.f32 %v363, %v364
    %v366 = vsub.f32 1.0, %v365
    %v367 = vmul.f32 %v364, %v366
    %v368 = vadd.f32 %v364, %v367
    %vm369 = vweird.f32 %v363
    %vm370 = vweird.f32 %v364
    %vm371 = vmor %vm369, %vm370
    %v372 = vsel %vm371, %v364, %v368
    %v373 = vand.u32 2147483647, %v363
    %vm374 = vcmp.eq.f32.partialorder %v373, 8.507059e+37
    %v375 = vand.u32 %v363, 2147483648
    %v376 = vor.u32 1.1754944e-38, %v375
    %v377 = vsel %vm374, %v376, %v372
    %v378 = vmul.f32 1.0, %v377
    %379 = vst [vmem:[#allocation3] sm:$0x1] %v378
    // Predicated region
    $region38: #{tpu_custom_call.1} parent=1 // pred_check
      _
    $region39: #{tpu_custom_call.1} parent=1 // pred_check_branch
      %381 = sbr.rel (0) target = $region41
    $region40: #{tpu_custom_call.1} parent=1 // pred_region
      %383 = vsyncadd [#allocation4], 0
      %s385 = sshll.u32 [#allocation3], 4
      %s386 = int_to_ptr.vmem [resolvable:$true] %s385
      %s387 = sshll.u32 %s9, 4
      %s388 = int_to_ptr.hbm [resolvable:$true] %s387
      %390 = dma.vmem_to_hbm [thread:$0]  %s386, 16, %s388, [#allocation4]
    $region41: #{tpu_custom_call.1} parent=1 // pred_fallthru
      _
    // Predicated region
    $region42: #{tpu_custom_call.1} parent=1 // pred_check
      _
    $region43: #{tpu_custom_call.1} parent=1 // pred_check_branch
      %392 = sbr.rel (0) target = $region45
    $region44: #{tpu_custom_call.1} parent=1 // pred_region
      %394 = dma.done [#allocation4], 16
    $region45: #{tpu_custom_call.1} parent=1 // pred_fallthru
      _
    %395 = vsyncpa [#allocation4], 1

</llo_original>
